<compile_context>
chip_gen: v5e
topology: v5e:2x2
jax: 0.10.0
libtpu: 0.0.40
codegen_flags: <defaults>
</compile_context>

<pallas_src>
import functools

import jax
import jax.numpy as jnp
from jax.experimental import pallas as pl
from jax.experimental.pallas import tpu as pltpu


# ---------------------------------------------------------------------------
# VMEM budgeting / tile choice (generation-aware: v7x 64 MiB, v5e/v6e 128 MiB).
# ---------------------------------------------------------------------------
def _vmem_caps():
    cap = 64 << 20
    try:
        info = pltpu.get_tpu_info()
        cap = int(getattr(info, "vmem_capacity_bytes", cap) or cap)
    except Exception:
        pass
    budget = min(cap // 2, 48 << 20)                       # working-set target
    limit = max(min(cap - (8 << 20), 100 << 20), 32 << 20)  # explicit scoped limit
    return budget, int(limit)


def _round_up(x, m):
    return ((x + m - 1) // m) * m


def _pick_tm(n_pad, resident_bytes, out_bytes_per_row, budget):
    """Largest row tile whose double-buffered working set fits the budget."""
    cands = [c for c in (512, 256, 128, 64, 32, 16, 8)
             if c <= n_pad and n_pad % c == 0]
    if not cands:
        cands = [n_pad]
    for tm in cands:
        work = 2 * tm * n_pad * 2            # bf16 adj stripe, double-buffered
        work += 2 * tm * out_bytes_per_row   # outputs, double-buffered
        work += 2 * tm * 16 * 4              # alpha_tgt + minv stripes
        if resident_bytes + work <= budget:
            return tm
    return cands[-1]


# ---------------------------------------------------------------------------
# GAT attention kernel (per row tile), with optional fused cluster head.
# ---------------------------------------------------------------------------
def _make_gat_kernel(H, C, neg_slope, concat, apply_elu, fuse_head, v):
    def attention_heads(alpha_t, alpha_sT, mask, m, feat):
        outs = []
        for h in range(H):                                   # heads: static unroll
            a_t = alpha_t[:, h:h + 1]                        # (TM, 1) target score
            a_s = alpha_sT[h:h + 1, :]                       # (1, N)  source score
            e = (a_t + a_s) * m                              # (TM, N), M_i >= 0
            e = jnp.where(e > 0, e, neg_slope * e)           # leaky_relu
            e = jnp.where(mask, e, -1e30)                    # mask non-edges
            e = e - jnp.max(e, axis=1, keepdims=True)
            p = jnp.exp(e)                                   # masked -> exactly 0
            inv = pl.reciprocal(jnp.sum(p, axis=1, keepdims=True), approx=True)
            feat_h = feat[:, h * C:(h + 1) * C].astype(jnp.bfloat16)
            agg = jnp.dot(p.astype(jnp.bfloat16), feat_h,
                          preferred_element_type=jnp.float32)   # (TM, C)
            outs.append(agg * inv)                           # normalise TM*C, not N^2
        return outs

    if not fuse_head:
        def kernel(alpha_t_ref, minv_ref, adj_ref, alpha_sT_ref, feat_ref,
                   bias_ref, out_ref):
            mask = adj_ref[...] > 0                          # head-invariant, hoisted
            m = minv_ref[...]
            feat = feat_ref[...]
            outs = attention_heads(alpha_t_ref[...], alpha_sT_ref[...],
                                   mask, m, feat)
            if concat:
                out = jnp.concatenate(outs, axis=1)          # (TM, H*C)
            else:
                out = sum(outs) * (1.0 / H)                  # (TM, C)
            out = out + bias_ref[...]
            if apply_elu:
                out = jnp.where(out > 0, out,
                                jnp.exp(jnp.minimum(out, 0.0)) - 1.0)
            out_ref[...] = out
        return kernel

    power = (float(v) + 1.0) / 2.0

    def kernel(alpha_t_ref, minv_ref, adj_ref, alpha_sT_ref, feat_ref,
               bias_ref, wc_ref, bc_ref, clu_ref, z_ref, q_ref, c_ref):
        mask = adj_ref[...] > 0
        m = minv_ref[...]
        feat = feat_ref[...]
        outs = attention_heads(alpha_t_ref[...], alpha_sT_ref[...],
                               mask, m, feat)
        if concat:
            z = jnp.concatenate(outs, axis=1) + bias_ref[...]
        else:
            z = sum(outs) * (1.0 / H) + bias_ref[...]        # (TM, n_z)
        z_ref[...] = z

        # classifier: log_softmax(Linear(relu(z)))
        logits = jnp.dot(jnp.maximum(z, 0.0), wc_ref[...],
                         preferred_element_type=jnp.float32) + bc_ref[...]
        mx = jnp.max(logits, axis=1, keepdims=True)
        lse = mx + jnp.log(jnp.sum(jnp.exp(logits - mx), axis=1, keepdims=True))
        c_ref[...] = logits - lse

        # student-t soft assignment: q_ik ~ (1 + ||z_i - mu_k||^2 / v)^-(v+1)/2
        clu = clu_ref[...]                                   # (n_z, K) = cluster^T
        z2 = jnp.sum(z * z, axis=1, keepdims=True)
        c2 = jnp.sum(clu * clu, axis=0, keepdims=True)
        cross = jnp.dot(z, clu, preferred_element_type=jnp.float32)
        dist2 = jnp.maximum(z2 + c2 - 2.0 * cross, 0.0)
        q = 1.0 / (1.0 + dist2 / v)
        if power != 1.0:                                     # skip pow for v == 1
            q = q ** power
        q_ref[...] = q / jnp.sum(q, axis=1, keepdims=True)

    return kernel


# ---------------------------------------------------------------------------
# Layer wrapper: row-tiled pallas_call over (projected feats, scores, adj).
# ---------------------------------------------------------------------------
def gat_layer(feat, alpha, adj_bf, minv, bias, *, heads, out_channels, concat,
              apply_elu=False, neg_slope=0.2, head=None, v=1.0):
    n_pad = adj_bf.shape[0]
    HC = heads * out_channels
    out_w = HC if concat else out_channels
    budget, vmem_limit = _vmem_caps()

    resident = n_pad * HC * 4 + heads * n_pad * 4 + out_w * 4
    out_row_bytes = out_w * 4
    if head is not None:
        K = head[0].shape[1]
        resident += (2 * out_channels * K + K) * 4
        out_row_bytes += 2 * K * 4
    tm = _pick_tm(n_pad, resident, out_row_bytes, budget)
    grid = (n_pad // tm,)

    kernel = _make_gat_kernel(heads, out_channels, neg_slope, concat,
                              apply_elu, head is not None, float(v))

    in_specs = [
        pl.BlockSpec((tm, heads), lambda i: (i, 0)),        # target scores
        pl.BlockSpec((tm, 1), lambda i: (i, 0)),            # M_i
        pl.BlockSpec((tm, n_pad), lambda i: (i, 0)),        # adj row stripe (bf16)
        pl.BlockSpec((heads, n_pad), lambda i: (0, 0)),     # source scores, resident
        pl.BlockSpec((n_pad, HC), lambda i: (0, 0)),        # projected feats, resident
        pl.BlockSpec((1, out_w), lambda i: (0, 0)),         # bias
    ]
    args = [alpha, minv, adj_bf, alpha.T, feat, bias.reshape(1, out_w)]

    if head is None:
        out_shape = jax.ShapeDtypeStruct((n_pad, out_w), jnp.float32)
        out_specs = pl.BlockSpec((tm, out_w), lambda i: (i, 0))
    else:
        wc, bc, cluster = head
        K = wc.shape[1]
        in_specs += [
            pl.BlockSpec((out_channels, K), lambda i: (0, 0)),   # classifier W
            pl.BlockSpec((1, K), lambda i: (0, 0)),              # classifier b
            pl.BlockSpec((out_channels, K), lambda i: (0, 0)),   # cluster_layer^T
        ]
        args += [wc, bc.reshape(1, K), cluster.T]
        out_shape = (jax.ShapeDtypeStruct((n_pad, out_w), jnp.float32),
                     jax.ShapeDtypeStruct((n_pad, K), jnp.float32),
                     jax.ShapeDtypeStruct((n_pad, K), jnp.float32))
        out_specs = (pl.BlockSpec((tm, out_w), lambda i: (i, 0)),
                     pl.BlockSpec((tm, K), lambda i: (i, 0)),
                     pl.BlockSpec((tm, K), lambda i: (i, 0)))

    return pl.pallas_call(
        kernel,
        out_shape=out_shape,
        grid=grid,
        in_specs=in_specs,
        out_specs=out_specs,
        compiler_params=pltpu.CompilerParams(
            dimension_semantics=("parallel",),
            vmem_limit_bytes=vmem_limit),
    )(*args)


# ---------------------------------------------------------------------------
# Full ADAEGCEncoder forward (eval mode).
# ---------------------------------------------------------------------------
@functools.partial(jax.jit,
                   static_argnames=("n_head_1", "n_hidden", "n_head_2", "n_z",
                                    "order_t", "v"))
def adaegc_forward(x, adj, params, *, n_head_1, n_hidden, n_head_2, n_z,
                   order_t=2, v=1.0):
    N = x.shape[0]
    n_pad = _round_up(N, 8) if N <= 64 else _round_up(N, 128)
    if n_pad != N:
        x = jnp.pad(x, ((0, n_pad - N), (0, 0)))
        adj = jnp.pad(adj, ((0, n_pad - N), (0, n_pad - N)))

    # M_i = sum_{t=1..order_t} (1/deg_i)^t, deg = in-degree incl. self loops.
    deg = jnp.maximum(jnp.sum(adj, axis=1, keepdims=True), 1.0)
    inv = 1.0 / deg
    minv = sum(inv ** t for t in range(1, order_t + 1)).astype(jnp.float32)

    adj_bf = adj.astype(jnp.bfloat16)    # exact for a 0/1 mask; halves N^2 traffic

    # layer 1: projection (XLA matmul) + Pallas attention, concat=True, + elu
    feat1 = jnp.dot(x, params["w1"], preferred_element_type=jnp.float32)
    alpha1 = jnp.einsum("nhc,hc->nh",
                        feat1.reshape(n_pad, n_head_1, n_hidden),
                        params["att1"]).astype(jnp.float32)
    h1 = gat_layer(feat1, alpha1, adj_bf, minv, params["b1"],
                   heads=n_head_1, out_channels=n_hidden,
                   concat=True, apply_elu=True)

    # layer 2: projection + Pallas attention (concat=False -> head mean), fused
    # with the classifier log-softmax and the student-t soft assignment.
    feat2 = jnp.dot(h1, params["w2"], preferred_element_type=jnp.float32)
    alpha2 = jnp.einsum("nhc,hc->nh",
                        feat2.reshape(n_pad, n_head_2, n_z),
                        params["att2"]).astype(jnp.float32)
    z, q, c = gat_layer(feat2, alpha2, adj_bf, minv, params["b2"],
                        heads=n_head_2, out_channels=n_z,
                        concat=False, apply_elu=False,
                        head=(params["wc"], params["bc"], params["cluster"]),
                        v=v)
    return z[:N], q[:N], c[:N]


# ---------------------------------------------------------------------------
# Deterministic parameter / input construction and a smoke run.
# ---------------------------------------------------------------------------
def glorot(key, shape, fan_in, fan_out):
    lim = jnp.sqrt(6.0 / (fan_in + fan_out))
    return jax.random.uniform(key, shape, jnp.float32, -lim, lim)


if __name__ == "__main__":
    # Small shapes consistent with the module.
    N = 16            # number of graph nodes
    n_input = 16
    n_hidden = 8
    n_head_1 = 2
    n_z = 8
    n_head_2 = 2
    n_clusters = 4
    v = 1.0

    key = jax.random.PRNGKey(0)
    keys = jax.random.split(key, 10)

    # node features
    x = jax.random.normal(keys[0], (N, n_input), jnp.float32)

    # dense adjacency: adj[i, j] = 1 iff edge (source j -> target i);
    # remove self loops then add self loops (as MGATConv does).
    a = (jax.random.uniform(keys[1], (N, N)) < 0.25).astype(jnp.float32)
    a = a * (1.0 - jnp.eye(N, dtype=jnp.float32))        # remove self loops
    adj = a + jnp.eye(N, dtype=jnp.float32)              # add self loops

    params = {
        # conv1: lin_l weight (n_input -> H1*C1), att_l (H1, C1), bias (H1*C1)
        "w1":   glorot(keys[2], (n_input, n_head_1 * n_hidden),
                       n_input, n_head_1 * n_hidden),
        "att1": glorot(keys[3], (n_head_1, n_hidden), n_hidden, n_hidden),
        "b1":   jnp.zeros((n_head_1 * n_hidden,), jnp.float32),
        # conv2: lin_l weight (H1*C1 -> H2*n_z), att_l (H2, n_z), bias (n_z)
        "w2":   glorot(keys[4], (n_head_1 * n_hidden, n_head_2 * n_z),
                       n_head_1 * n_hidden, n_head_2 * n_z),
        "att2": glorot(keys[5], (n_head_2, n_z), n_z, n_z),
        "b2":   jnp.zeros((n_z,), jnp.float32),
        # classifier Linear(n_z, n_clusters)
        "wc":   glorot(keys[6], (n_z, n_clusters), n_z, n_clusters),
        "bc":   0.01 * jax.random.normal(keys[7], (n_clusters,), jnp.float32),
        # cluster_layer (n_clusters, n_z), xavier_normal-style
        "cluster": jax.random.normal(keys[8], (n_clusters, n_z), jnp.float32)
                   * jnp.sqrt(2.0 / (n_clusters + n_z)),
    }

    z, q, c = adaegc_forward(x, adj, params,
                             n_head_1=n_head_1, n_hidden=n_hidden,
                             n_head_2=n_head_2, n_z=n_z, order_t=2, v=v)
    jax.block_until_ready((z, q, c))

    assert z.shape == (N, n_z)
    assert q.shape == (N, n_clusters)
    assert c.shape == (N, n_clusters)
    assert bool(jnp.all(jnp.isfinite(z)))
    # sanity: q rows sum to 1, c rows are log-probabilities
    assert jnp.allclose(jnp.sum(q, axis=1), 1.0, atol=1e-5)
    assert jnp.allclose(jnp.sum(jnp.exp(c), axis=1), 1.0, atol=1e-5)

    print("KERNEL_OK")
</pallas_src>

<mosaic_0001>
module attributes {stable_mosaic.version = 11 : i64} {
  func.func @kernel(%arg0: i32, %arg1: memref<16x2xf32, #tpu.memory_space<vmem>>, %arg2: memref<16x1xf32, #tpu.memory_space<vmem>>, %arg3: memref<16x16xbf16, #tpu.memory_space<vmem>>, %arg4: memref<2x16xf32, #tpu.memory_space<vmem>>, %arg5: memref<16x16xf32, #tpu.memory_space<vmem>>, %arg6: memref<1x16xf32, #tpu.memory_space<vmem>>, %arg7: memref<16x16xf32, #tpu.memory_space<vmem>>) attributes {dimension_semantics = [#tpu.dimension_semantics<parallel>], iteration_bounds = array<i64: 1>, scalar_prefetch = 0 : i64, scratch_operands = 0 : i64, tpu.core_type = #tpu.core_type<tc>, window_params = [{transform_indices = @transform_0, window_bounds = array<i64: 16, 2>}, {transform_indices = @transform_1, window_bounds = array<i64: 16, 1>}, {transform_indices = @transform_2, window_bounds = array<i64: 16, 16>}, {pipeline_mode = #tpu.pipeline_mode<synchronous>, transform_indices = @transform_3, window_bounds = array<i64: 2, 16>}, {pipeline_mode = #tpu.pipeline_mode<synchronous>, transform_indices = @transform_4, window_bounds = array<i64: 16, 16>}, {pipeline_mode = #tpu.pipeline_mode<synchronous>, transform_indices = @transform_5, window_bounds = array<i64: 1, 16>}, {transform_indices = @transform_6, window_bounds = array<i64: 16, 16>}]} {
    %c0 = arith.constant 0 : index
    %c0_0 = arith.constant 0 : index
    %0 = vector.load %arg3[%c0, %c0_0] : memref<16x16xbf16, #tpu.memory_space<vmem>>, vector<16x16xbf16>
    %cst = arith.constant 0.000000e+00 : bf16
    %1 = vector.broadcast %cst : bf16 to vector<16x16xbf16>
    %2 = arith.cmpf ogt, %0, %1 : vector<16x16xbf16>
    %c0_1 = arith.constant 0 : index
    %c0_2 = arith.constant 0 : index
    %3 = vector.load %arg2[%c0_1, %c0_2] : memref<16x1xf32, #tpu.memory_space<vmem>>, vector<16x1xf32>
    %c0_3 = arith.constant 0 : index
    %c0_4 = arith.constant 0 : index
    %4 = vector.load %arg5[%c0_3, %c0_4] : memref<16x16xf32, #tpu.memory_space<vmem>>, vector<16x16xf32>
    %c0_5 = arith.constant 0 : index
    %c0_6 = arith.constant 0 : index
    %5 = vector.load %arg1[%c0_5, %c0_6] : memref<16x2xf32, #tpu.memory_space<vmem>>, vector<16x2xf32>
    %c0_7 = arith.constant 0 : index
    %c0_8 = arith.constant 0 : index
    %6 = vector.load %arg4[%c0_7, %c0_8] : memref<2x16xf32, #tpu.memory_space<vmem>>, vector<2x16xf32>
    %7 = vector.extract_strided_slice %5 {offsets = [0, 0], sizes = [16, 1], strides = [1, 1]} : vector<16x2xf32> to vector<16x1xf32>
    %8 = vector.extract_strided_slice %6 {offsets = [0, 0], sizes = [1, 16], strides = [1, 1]} : vector<2x16xf32> to vector<1x16xf32>
    %9 = vector.broadcast %7 : vector<16x1xf32> to vector<16x16xf32>
    %10 = vector.broadcast %8 : vector<1x16xf32> to vector<16x16xf32>
    %11 = arith.addf %9, %10 : vector<16x16xf32>
    %12 = vector.broadcast %3 : vector<16x1xf32> to vector<16x16xf32>
    %13 = arith.mulf %11, %12 : vector<16x16xf32>
    %cst_9 = arith.constant 0.000000e+00 : f32
    %14 = vector.broadcast %cst_9 : f32 to vector<16x16xf32>
    %15 = arith.cmpf ogt, %13, %14 : vector<16x16xf32>
    %cst_10 = arith.constant 2.000000e-01 : f32
    %16 = vector.broadcast %cst_10 : f32 to vector<16x16xf32>
    %17 = arith.mulf %16, %13 : vector<16x16xf32>
    %18 = arith.select %15, %13, %17 : vector<16x16xi1>, vector<16x16xf32>
    %cst_11 = arith.constant -1.000000e+30 : f32
    %19 = vector.broadcast %cst_11 : f32 to vector<16x16xf32>
    %20 = arith.select %2, %18, %19 : vector<16x16xi1>, vector<16x16xf32>
    %cst_12 = arith.constant dense<0xFF800000> : vector<16xf32>
    %21 = vector.multi_reduction <maximumf>, %20, %cst_12 [1] : vector<16x16xf32> to vector<16xf32>
    %22 = vector.shape_cast %21 : vector<16xf32> to vector<16x1xf32>
    %23 = vector.broadcast %22 : vector<16x1xf32> to vector<16x16xf32>
    %24 = arith.subf %20, %23 : vector<16x16xf32>
    %25 = math.exp %24 : vector<16x16xf32>
    %cst_13 = arith.constant dense<0.000000e+00> : vector<16xf32>
    %26 = vector.multi_reduction <add>, %25, %cst_13 [1] : vector<16x16xf32> to vector<16xf32>
    %27 = vector.shape_cast %26 : vector<16xf32> to vector<16x1xf32>
    %28 = tpu.reciprocal %27 {approx = true} : vector<16x1xf32> -> vector<16x1xf32>
    %29 = vector.extract_strided_slice %4 {offsets = [0, 0], sizes = [16, 8], strides = [1, 1]} : vector<16x16xf32> to vector<16x8xf32>
    %30 = arith.truncf %29 : vector<16x8xf32> to vector<16x8xbf16>
    %31 = arith.truncf %25 : vector<16x16xf32> to vector<16x16xbf16>
    %cst_14 = arith.constant dense<0.000000e+00> : vector<16x8xf32>
    %32 = tpu.matmul %31, %30, %cst_14 {dimension_numbers = #tpu.dot_dimension_numbers<[1], [0], [0], [1], [0, 0, 1, 1], [], []>} : vector<16x16xbf16>, vector<16x8xbf16>, vector<16x8xf32> -> vector<16x8xf32>
    %33 = vector.broadcast %28 : vector<16x1xf32> to vector<16x8xf32>
    %34 = arith.mulf %32, %33 : vector<16x8xf32>
    %35 = vector.extract_strided_slice %5 {offsets = [0, 1], sizes = [16, 1], strides = [1, 1]} : vector<16x2xf32> to vector<16x1xf32>
    %36 = vector.extract_strided_slice %6 {offsets = [1, 0], sizes = [1, 16], strides = [1, 1]} : vector<2x16xf32> to vector<1x16xf32>
    %37 = vector.broadcast %35 : vector<16x1xf32> to vector<16x16xf32>
    %38 = vector.broadcast %36 : vector<1x16xf32> to vector<16x16xf32>
    %39 = arith.addf %37, %38 : vector<16x16xf32>
    %40 = vector.broadcast %3 : vector<16x1xf32> to vector<16x16xf32>
    %41 = arith.mulf %39, %40 : vector<16x16xf32>
    %cst_15 = arith.constant 0.000000e+00 : f32
    %42 = vector.broadcast %cst_15 : f32 to vector<16x16xf32>
    %43 = arith.cmpf ogt, %41, %42 : vector<16x16xf32>
    %cst_16 = arith.constant 2.000000e-01 : f32
    %44 = vector.broadcast %cst_16 : f32 to vector<16x16xf32>
    %45 = arith.mulf %44, %41 : vector<16x16xf32>
    %46 = arith.select %43, %41, %45 : vector<16x16xi1>, vector<16x16xf32>
    %cst_17 = arith.constant -1.000000e+30 : f32
    %47 = vector.broadcast %cst_17 : f32 to vector<16x16xf32>
    %48 = arith.select %2, %46, %47 : vector<16x16xi1>, vector<16x16xf32>
    %cst_18 = arith.constant dense<0xFF800000> : vector<16xf32>
    %49 = vector.multi_reduction <maximumf>, %48, %cst_18 [1] : vector<16x16xf32> to vector<16xf32>
    %50 = vector.shape_cast %49 : vector<16xf32> to vector<16x1xf32>
    %51 = vector.broadcast %50 : vector<16x1xf32> to vector<16x16xf32>
    %52 = arith.subf %48, %51 : vector<16x16xf32>
    %53 = math.exp %52 : vector<16x16xf32>
    %cst_19 = arith.constant dense<0.000000e+00> : vector<16xf32>
    %54 = vector.multi_reduction <add>, %53, %cst_19 [1] : vector<16x16xf32> to vector<16xf32>
    %55 = vector.shape_cast %54 : vector<16xf32> to vector<16x1xf32>
    %56 = tpu.reciprocal %55 {approx = true} : vector<16x1xf32> -> vector<16x1xf32>
    %57 = vector.extract_strided_slice %4 {offsets = [0, 8], sizes = [16, 8], strides = [1, 1]} : vector<16x16xf32> to vector<16x8xf32>
    %58 = arith.truncf %57 : vector<16x8xf32> to vector<16x8xbf16>
    %59 = arith.truncf %53 : vector<16x16xf32> to vector<16x16xbf16>
    %cst_20 = arith.constant dense<0.000000e+00> : vector<16x8xf32>
    %60 = tpu.matmul %59, %58, %cst_20 {dimension_numbers = #tpu.dot_dimension_numbers<[1], [0], [0], [1], [0, 0, 1, 1], [], []>} : vector<16x16xbf16>, vector<16x8xbf16>, vector<16x8xf32> -> vector<16x8xf32>
    %61 = vector.broadcast %56 : vector<16x1xf32> to vector<16x8xf32>
    %62 = arith.mulf %60, %61 : vector<16x8xf32>
    %63 = tpu.concatenate %34, %62 in 1 : vector<16x8xf32>, vector<16x8xf32> -> vector<16x16xf32>
    %c0_21 = arith.constant 0 : index
    %c0_22 = arith.constant 0 : index
    %64 = vector.load %arg6[%c0_21, %c0_22] : memref<1x16xf32, #tpu.memory_space<vmem>>, vector<1x16xf32>
    %65 = vector.broadcast %64 : vector<1x16xf32> to vector<16x16xf32>
    %66 = arith.addf %63, %65 : vector<16x16xf32>
    %cst_23 = arith.constant 0.000000e+00 : f32
    %67 = vector.broadcast %cst_23 : f32 to vector<16x16xf32>
    %68 = arith.cmpf ogt, %66, %67 : vector<16x16xf32>
    %cst_24 = arith.constant 0.000000e+00 : f32
    %69 = vector.broadcast %cst_24 : f32 to vector<16x16xf32>
    %70 = arith.minimumf %66, %69 : vector<16x16xf32>
    %71 = math.exp %70 : vector<16x16xf32>
    %cst_25 = arith.constant 1.000000e+00 : f32
    %72 = vector.broadcast %cst_25 : f32 to vector<16x16xf32>
    %73 = arith.subf %71, %72 : vector<16x16xf32>
    %74 = arith.select %68, %66, %73 : vector<16x16xi1>, vector<16x16xf32>
    %c0_26 = arith.constant 0 : index
    %c0_27 = arith.constant 0 : index
    %75 = vector.load %arg7[%c0_26, %c0_27] : memref<16x16xf32, #tpu.memory_space<vmem>>, vector<16x16xf32>
    tpu.vector_store %arg7[%c0_26, %c0_27], %74 {strides = array<i32>} : memref<16x16xf32, #tpu.memory_space<vmem>>, vector<16x16xf32>,
    return
  }
  func.func @transform_0(%arg0: i32) -> (i32, i32) {
    %c0_i32 = arith.constant 0 : i32
    %c0_i32_0 = arith.constant 0 : i32
    return %arg0, %c0_i32 : i32, i32
  }
  func.func @transform_1(%arg0: i32) -> (i32, i32) {
    %c0_i32 = arith.constant 0 : i32
    %c0_i32_0 = arith.constant 0 : i32
    return %arg0, %c0_i32 : i32, i32
  }
  func.func @transform_2(%arg0: i32) -> (i32, i32) {
    %c0_i32 = arith.constant 0 : i32
    %c0_i32_0 = arith.constant 0 : i32
    return %arg0, %c0_i32 : i32, i32
  }
  func.func @transform_3(%arg0: i32) -> (i32, i32) {
    %c0_i32 = arith.constant 0 : i32
    %c0_i32_0 = arith.constant 0 : i32
    %c0_i32_1 = arith.constant 0 : i32
    return %c0_i32, %c0_i32_0 : i32, i32
  }
  func.func @transform_4(%arg0: i32) -> (i32, i32) {
    %c0_i32 = arith.constant 0 : i32
    %c0_i32_0 = arith.constant 0 : i32
    %c0_i32_1 = arith.constant 0 : i32
    return %c0_i32, %c0_i32_0 : i32, i32
  }
  func.func @transform_5(%arg0: i32) -> (i32, i32) {
    %c0_i32 = arith.constant 0 : i32
    %c0_i32_0 = arith.constant 0 : i32
    %c0_i32_1 = arith.constant 0 : i32
    return %c0_i32, %c0_i32_0 : i32, i32
  }
  func.func @transform_6(%arg0: i32) -> (i32, i32) {
    %c0_i32 = arith.constant 0 : i32
    %c0_i32_0 = arith.constant 0 : i32
    return %arg0, %c0_i32 : i32, i32
  }
}

module attributes {stable_mosaic.version = 11 : i64} {
  func.func @kernel(%arg0: i32, %arg1: memref<16x2xf32, #tpu.memory_space<vmem>>, %arg2: memref<16x1xf32, #tpu.memory_space<vmem>>, %arg3: memref<16x16xbf16, #tpu.memory_space<vmem>>, %arg4: memref<2x16xf32, #tpu.memory_space<vmem>>, %arg5: memref<16x16xf32, #tpu.memory_space<vmem>>, %arg6: memref<1x8xf32, #tpu.memory_space<vmem>>, %arg7: memref<8x4xf32, #tpu.memory_space<vmem>>, %arg8: memref<1x4xf32, #tpu.memory_space<vmem>>, %arg9: memref<8x4xf32, #tpu.memory_space<vmem>>, %arg10: memref<16x8xf32, #tpu.memory_space<vmem>>, %arg11: memref<16x4xf32, #tpu.memory_space<vmem>>, %arg12: memref<16x4xf32, #tpu.memory_space<vmem>>) attributes {dimension_semantics = [#tpu.dimension_semantics<parallel>], iteration_bounds = array<i64: 1>, scalar_prefetch = 0 : i64, scratch_operands = 0 : i64, tpu.core_type = #tpu.core_type<tc>, window_params = [{transform_indices = @transform_0, window_bounds = array<i64: 16, 2>}, {transform_indices = @transform_1, window_bounds = array<i64: 16, 1>}, {transform_indices = @transform_2, window_bounds = array<i64: 16, 16>}, {pipeline_mode = #tpu.pipeline_mode<synchronous>, transform_indices = @transform_3, window_bounds = array<i64: 2, 16>}, {pipeline_mode = #tpu.pipeline_mode<synchronous>, transform_indices = @transform_4, window_bounds = array<i64: 16, 16>}, {pipeline_mode = #tpu.pipeline_mode<synchronous>, transform_indices = @transform_5, window_bounds = array<i64: 1, 8>}, {pipeline_mode = #tpu.pipeline_mode<synchronous>, transform_indices = @transform_6, window_bounds = array<i64: 8, 4>}, {pipeline_mode = #tpu.pipeline_mode<synchronous>, transform_indices = @transform_7, window_bounds = array<i64: 1, 4>}, {pipeline_mode = #tpu.pipeline_mode<synchronous>, transform_indices = @transform_8, window_bounds = array<i64: 8, 4>}, {transform_indices = @transform_9, window_bounds = array<i64: 16, 8>}, {transform_indices = @transform_10, window_bounds = array<i64: 16, 4>}, {transform_indices = @transform_11, window_bounds = array<i64: 16, 4>}]} {
    %c0 = arith.constant 0 : index
    %c0_0 = arith.constant 0 : index
    %0 = vector.load %arg3[%c0, %c0_0] : memref<16x16xbf16, #tpu.memory_space<vmem>>, vector<16x16xbf16>
    %cst = arith.constant 0.000000e+00 : bf16
    %1 = vector.broadcast %cst : bf16 to vector<16x16xbf16>
    %2 = arith.cmpf ogt, %0, %1 : vector<16x16xbf16>
    %c0_1 = arith.constant 0 : index
    %c0_2 = arith.constant 0 : index
    %3 = vector.load %arg2[%c0_1, %c0_2] : memref<16x1xf32, #tpu.memory_space<vmem>>, vector<16x1xf32>
    %c0_3 = arith.constant 0 : index
    %c0_4 = arith.constant 0 : index
    %4 = vector.load %arg5[%c0_3, %c0_4] : memref<16x16xf32, #tpu.memory_space<vmem>>, vector<16x16xf32>
    %c0_5 = arith.constant 0 : index
    %c0_6 = arith.constant 0 : index
    %5 = vector.load %arg1[%c0_5, %c0_6] : memref<16x2xf32, #tpu.memory_space<vmem>>, vector<16x2xf32>
    %c0_7 = arith.constant 0 : index
    %c0_8 = arith.constant 0 : index
    %6 = vector.load %arg4[%c0_7, %c0_8] : memref<2x16xf32, #tpu.memory_space<vmem>>, vector<2x16xf32>
    %7 = vector.extract_strided_slice %5 {offsets = [0, 0], sizes = [16, 1], strides = [1, 1]} : vector<16x2xf32> to vector<16x1xf32>
    %8 = vector.extract_strided_slice %6 {offsets = [0, 0], sizes = [1, 16], strides = [1, 1]} : vector<2x16xf32> to vector<1x16xf32>
    %9 = vector.broadcast %7 : vector<16x1xf32> to vector<16x16xf32>
    %10 = vector.broadcast %8 : vector<1x16xf32> to vector<16x16xf32>
    %11 = arith.addf %9, %10 : vector<16x16xf32>
    %12 = vector.broadcast %3 : vector<16x1xf32> to vector<16x16xf32>
    %13 = arith.mulf %11, %12 : vector<16x16xf32>
    %cst_9 = arith.constant 0.000000e+00 : f32
    %14 = vector.broadcast %cst_9 : f32 to vector<16x16xf32>
    %15 = arith.cmpf ogt, %13, %14 : vector<16x16xf32>
    %cst_10 = arith.constant 2.000000e-01 : f32
    %16 = vector.broadcast %cst_10 : f32 to vector<16x16xf32>
    %17 = arith.mulf %16, %13 : vector<16x16xf32>
    %18 = arith.select %15, %13, %17 : vector<16x16xi1>, vector<16x16xf32>
    %cst_11 = arith.constant -1.000000e+30 : f32
    %19 = vector.broadcast %cst_11 : f32 to vector<16x16xf32>
    %20 = arith.select %2, %18, %19 : vector<16x16xi1>, vector<16x16xf32>
    %cst_12 = arith.constant dense<0xFF800000> : vector<16xf32>
    %21 = vector.multi_reduction <maximumf>, %20, %cst_12 [1] : vector<16x16xf32> to vector<16xf32>
    %22 = vector.shape_cast %21 : vector<16xf32> to vector<16x1xf32>
    %23 = vector.broadcast %22 : vector<16x1xf32> to vector<16x16xf32>
    %24 = arith.subf %20, %23 : vector<16x16xf32>
    %25 = math.exp %24 : vector<16x16xf32>
    %cst_13 = arith.constant dense<0.000000e+00> : vector<16xf32>
    %26 = vector.multi_reduction <add>, %25, %cst_13 [1] : vector<16x16xf32> to vector<16xf32>
    %27 = vector.shape_cast %26 : vector<16xf32> to vector<16x1xf32>
    %28 = tpu.reciprocal %27 {approx = true} : vector<16x1xf32> -> vector<16x1xf32>
    %29 = vector.extract_strided_slice %4 {offsets = [0, 0], sizes = [16, 8], strides = [1, 1]} : vector<16x16xf32> to vector<16x8xf32>
    %30 = arith.truncf %29 : vector<16x8xf32> to vector<16x8xbf16>
    %31 = arith.truncf %25 : vector<16x16xf32> to vector<16x16xbf16>
    %cst_14 = arith.constant dense<0.000000e+00> : vector<16x8xf32>
    %32 = tpu.matmul %31, %30, %cst_14 {dimension_numbers = #tpu.dot_dimension_numbers<[1], [0], [0], [1], [0, 0, 1, 1], [], []>} : vector<16x16xbf16>, vector<16x8xbf16>, vector<16x8xf32> -> vector<16x8xf32>
    %33 = vector.broadcast %28 : vector<16x1xf32> to vector<16x8xf32>
    %34 = arith.mulf %32, %33 : vector<16x8xf32>
    %35 = vector.extract_strided_slice %5 {offsets = [0, 1], sizes = [16, 1], strides = [1, 1]} : vector<16x2xf32> to vector<16x1xf32>
    %36 = vector.extract_strided_slice %6 {offsets = [1, 0], sizes = [1, 16], strides = [1, 1]} : vector<2x16xf32> to vector<1x16xf32>
    %37 = vector.broadcast %35 : vector<16x1xf32> to vector<16x16xf32>
    %38 = vector.broadcast %36 : vector<1x16xf32> to vector<16x16xf32>
    %39 = arith.addf %37, %38 : vector<16x16xf32>
    %40 = vector.broadcast %3 : vector<16x1xf32> to vector<16x16xf32>
    %41 = arith.mulf %39, %40 : vector<16x16xf32>
    %cst_15 = arith.constant 0.000000e+00 : f32
    %42 = vector.broadcast %cst_15 : f32 to vector<16x16xf32>
    %43 = arith.cmpf ogt, %41, %42 : vector<16x16xf32>
    %cst_16 = arith.constant 2.000000e-01 : f32
    %44 = vector.broadcast %cst_16 : f32 to vector<16x16xf32>
    %45 = arith.mulf %44, %41 : vector<16x16xf32>
    %46 = arith.select %43, %41, %45 : vector<16x16xi1>, vector<16x16xf32>
    %cst_17 = arith.constant -1.000000e+30 : f32
    %47 = vector.broadcast %cst_17 : f32 to vector<16x16xf32>
    %48 = arith.select %2, %46, %47 : vector<16x16xi1>, vector<16x16xf32>
    %cst_18 = arith.constant dense<0xFF800000> : vector<16xf32>
    %49 = vector.multi_reduction <maximumf>, %48, %cst_18 [1] : vector<16x16xf32> to vector<16xf32>
    %50 = vector.shape_cast %49 : vector<16xf32> to vector<16x1xf32>
    %51 = vector.broadcast %50 : vector<16x1xf32> to vector<16x16xf32>
    %52 = arith.subf %48, %51 : vector<16x16xf32>
    %53 = math.exp %52 : vector<16x16xf32>
    %cst_19 = arith.constant dense<0.000000e+00> : vector<16xf32>
    %54 = vector.multi_reduction <add>, %53, %cst_19 [1] : vector<16x16xf32> to vector<16xf32>
    %55 = vector.shape_cast %54 : vector<16xf32> to vector<16x1xf32>
    %56 = tpu.reciprocal %55 {approx = true} : vector<16x1xf32> -> vector<16x1xf32>
    %57 = vector.extract_strided_slice %4 {offsets = [0, 8], sizes = [16, 8], strides = [1, 1]} : vector<16x16xf32> to vector<16x8xf32>
    %58 = arith.truncf %57 : vector<16x8xf32> to vector<16x8xbf16>
    %59 = arith.truncf %53 : vector<16x16xf32> to vector<16x16xbf16>
    %cst_20 = arith.constant dense<0.000000e+00> : vector<16x8xf32>
    %60 = tpu.matmul %59, %58, %cst_20 {dimension_numbers = #tpu.dot_dimension_numbers<[1], [0], [0], [1], [0, 0, 1, 1], [], []>} : vector<16x16xbf16>, vector<16x8xbf16>, vector<16x8xf32> -> vector<16x8xf32>
    %61 = vector.broadcast %56 : vector<16x1xf32> to vector<16x8xf32>
    %62 = arith.mulf %60, %61 : vector<16x8xf32>
    %cst_21 = arith.constant 0.000000e+00 : f32
    %63 = vector.broadcast %cst_21 : f32 to vector<16x8xf32>
    %64 = arith.addf %63, %34 : vector<16x8xf32>
    %65 = arith.addf %64, %62 : vector<16x8xf32>
    %cst_22 = arith.constant 5.000000e-01 : f32
    %66 = vector.broadcast %cst_22 : f32 to vector<16x8xf32>
    %67 = arith.mulf %65, %66 : vector<16x8xf32>
    %c0_23 = arith.constant 0 : index
    %c0_24 = arith.constant 0 : index
    %68 = vector.load %arg6[%c0_23, %c0_24] : memref<1x8xf32, #tpu.memory_space<vmem>>, vector<1x8xf32>
    %69 = vector.broadcast %68 : vector<1x8xf32> to vector<16x8xf32>
    %70 = arith.addf %67, %69 : vector<16x8xf32>
    %c0_25 = arith.constant 0 : index
    %c0_26 = arith.constant 0 : index
    %71 = vector.load %arg10[%c0_25, %c0_26] : memref<16x8xf32, #tpu.memory_space<vmem>>, vector<16x8xf32>
    tpu.vector_store %arg10[%c0_25, %c0_26], %70 {strides = array<i32>} : memref<16x8xf32, #tpu.memory_space<vmem>>, vector<16x8xf32>,
    %cst_27 = arith.constant 0.000000e+00 : f32
    %72 = vector.broadcast %cst_27 : f32 to vector<16x8xf32>
    %73 = arith.maximumf %70, %72 : vector<16x8xf32>
    %c0_28 = arith.constant 0 : index
    %c0_29 = arith.constant 0 : index
    %74 = vector.load %arg7[%c0_28, %c0_29] : memref<8x4xf32, #tpu.memory_space<vmem>>, vector<8x4xf32>
    %cst_30 = arith.constant dense<0.000000e+00> : vector<16x4xf32>
    %75 = tpu.matmul %73, %74, %cst_30 {dimension_numbers = #tpu.dot_dimension_numbers<[1], [0], [0], [1], [0, 0, 1, 1], [], []>} : vector<16x8xf32>, vector<8x4xf32>, vector<16x4xf32> -> vector<16x4xf32>
    %c0_31 = arith.constant 0 : index
    %c0_32 = arith.constant 0 : index
    %76 = vector.load %arg8[%c0_31, %c0_32] : memref<1x4xf32, #tpu.memory_space<vmem>>, vector<1x4xf32>
    %77 = vector.broadcast %76 : vector<1x4xf32> to vector<16x4xf32>
    %78 = arith.addf %75, %77 : vector<16x4xf32>
    %cst_33 = arith.constant dense<0xFF800000> : vector<16xf32>
    %79 = vector.multi_reduction <maximumf>, %78, %cst_33 [1] : vector<16x4xf32> to vector<16xf32>
    %80 = vector.shape_cast %79 : vector<16xf32> to vector<16x1xf32>
    %81 = vector.broadcast %80 : vector<16x1xf32> to vector<16x4xf32>
    %82 = arith.subf %78, %81 : vector<16x4xf32>
    %83 = math.exp %82 : vector<16x4xf32>
    %cst_34 = arith.constant dense<0.000000e+00> : vector<16xf32>
    %84 = vector.multi_reduction <add>, %83, %cst_34 [1] : vector<16x4xf32> to vector<16xf32>
    %85 = vector.shape_cast %84 : vector<16xf32> to vector<16x1xf32>
    %86 = math.log %85 : vector<16x1xf32>
    %87 = arith.addf %80, %86 : vector<16x1xf32>
    %88 = vector.broadcast %87 : vector<16x1xf32> to vector<16x4xf32>
    %89 = arith.subf %78, %88 : vector<16x4xf32>
    %c0_35 = arith.constant 0 : index
    %c0_36 = arith.constant 0 : index
    %90 = vector.load %arg12[%c0_35, %c0_36] : memref<16x4xf32, #tpu.memory_space<vmem>>, vector<16x4xf32>
    tpu.vector_store %arg12[%c0_35, %c0_36], %89 {strides = array<i32>} : memref<16x4xf32, #tpu.memory_space<vmem>>, vector<16x4xf32>,
    %c0_37 = arith.constant 0 : index
    %c0_38 = arith.constant 0 : index
    %91 = vector.load %arg9[%c0_37, %c0_38] : memref<8x4xf32, #tpu.memory_space<vmem>>, vector<8x4xf32>
    %92 = arith.mulf %70, %70 : vector<16x8xf32>
    %cst_39 = arith.constant dense<0.000000e+00> : vector<16xf32>
    %93 = vector.multi_reduction <add>, %92, %cst_39 [1] : vector<16x8xf32> to vector<16xf32>
    %94 = vector.shape_cast %93 : vector<16xf32> to vector<16x1xf32>
    %95 = arith.mulf %91, %91 : vector<8x4xf32>
    %cst_40 = arith.constant dense<0.000000e+00> : vector<4xf32>
    %96 = vector.multi_reduction <add>, %95, %cst_40 [0] : vector<8x4xf32> to vector<4xf32>
    %97 = vector.shape_cast %96 : vector<4xf32> to vector<1x4xf32>
    %cst_41 = arith.constant dense<0.000000e+00> : vector<16x4xf32>
    %98 = tpu.matmul %70, %91, %cst_41 {dimension_numbers = #tpu.dot_dimension_numbers<[1], [0], [0], [1], [0, 0, 1, 1], [], []>} : vector<16x8xf32>, vector<8x4xf32>, vector<16x4xf32> -> vector<16x4xf32>
    %99 = vector.broadcast %94 : vector<16x1xf32> to vector<16x4xf32>
    %100 = vector.broadcast %97 : vector<1x4xf32> to vector<16x4xf32>
    %101 = arith.addf %99, %100 : vector<16x4xf32>
    %cst_42 = arith.constant 2.000000e+00 : f32
    %102 = vector.broadcast %cst_42 : f32 to vector<16x4xf32>
    %103 = arith.mulf %102, %98 : vector<16x4xf32>
    %104 = arith.subf %101, %103 : vector<16x4xf32>
    %cst_43 = arith.constant 0.000000e+00 : f32
    %105 = vector.broadcast %cst_43 : f32 to vector<16x4xf32>
    %106 = arith.maximumf %104, %105 : vector<16x4xf32>
    %cst_44 = arith.constant 1.000000e+00 : f32
    %107 = vector.broadcast %cst_44 : f32 to vector<16x4xf32>
    %108 = arith.divf %106, %107 : vector<16x4xf32>
    %cst_45 = arith.constant 1.000000e+00 : f32
    %109 = vector.broadcast %cst_45 : f32 to vector<16x4xf32>
    %110 = arith.addf %109, %108 : vector<16x4xf32>
    %cst_46 = arith.constant 1.000000e+00 : f32
    %111 = vector.broadcast %cst_46 : f32 to vector<16x4xf32>
    %112 = arith.divf %111, %110 : vector<16x4xf32>
    %cst_47 = arith.constant dense<0.000000e+00> : vector<16xf32>
    %113 = vector.multi_reduction <add>, %112, %cst_47 [1] : vector<16x4xf32> to vector<16xf32>
    %114 = vector.shape_cast %113 : vector<16xf32> to vector<16x1xf32>
    %115 = vector.broadcast %114 : vector<16x1xf32> to vector<16x4xf32>
    %116 = arith.divf %112, %115 : vector<16x4xf32>
    %c0_48 = arith.constant 0 : index
    %c0_49 = arith.constant 0 : index
    %117 = vector.load %arg11[%c0_48, %c0_49] : memref<16x4xf32, #tpu.memory_space<vmem>>, vector<16x4xf32>
    tpu.vector_store %arg11[%c0_48, %c0_49], %116 {strides = array<i32>} : memref<16x4xf32, #tpu.memory_space<vmem>>, vector<16x4xf32>,
    return
  }
  func.func @transform_0(%arg0: i32) -> (i32, i32) {
    %c0_i32 = arith.constant 0 : i32
    %c0_i32_0 = arith.constant 0 : i32
    return %arg0, %c0_i32 : i32, i32
  }
  func.func @transform_1(%arg0: i32) -> (i32, i32) {
    %c0_i32 = arith.constant 0 : i32
    %c0_i32_0 = arith.constant 0 : i32
    return %arg0, %c0_i32 : i32, i32
  }
  func.func @transform_2(%arg0: i32) -> (i32, i32) {
    %c0_i32 = arith.constant 0 : i32
    %c0_i32_0 = arith.constant 0 : i32
    return %arg0, %c0_i32 : i32, i32
  }
  func.func @transform_3(%arg0: i32) -> (i32, i32) {
    %c0_i32 = arith.constant 0 : i32
    %c0_i32_0 = arith.constant 0 : i32
    %c0_i32_1 = arith.constant 0 : i32
    return %c0_i32, %c0_i32_0 : i32, i32
  }
  func.func @transform_4(%arg0: i32) -> (i32, i32) {
    %c0_i32 = arith.constant 0 : i32
    %c0_i32_0 = arith.constant 0 : i32
    %c0_i32_1 = arith.constant 0 : i32
    return %c0_i32, %c0_i32_0 : i32, i32
  }
  func.func @transform_5(%arg0: i32) -> (i32, i32) {
    %c0_i32 = arith.constant 0 : i32
    %c0_i32_0 = arith.constant 0 : i32
    %c0_i32_1 = arith.constant 0 : i32
    return %c0_i32, %c0_i32_0 : i32, i32
  }
  func.func @transform_6(%arg0: i32) -> (i32, i32) {
    %c0_i32 = arith.constant 0 : i32
    %c0_i32_0 = arith.constant 0 : i32
    %c0_i32_1 = arith.constant 0 : i32
    return %c0_i32, %c0_i32_0 : i32, i32
  }
  func.func @transform_7(%arg0: i32) -> (i32, i32) {
    %c0_i32 = arith.constant 0 : i32
    %c0_i32_0 = arith.constant 0 : i32
    %c0_i32_1 = arith.constant 0 : i32
    return %c0_i32, %c0_i32_0 : i32, i32
  }
  func.func @transform_8(%arg0: i32) -> (i32, i32) {
    %c0_i32 = arith.constant 0 : i32
    %c0_i32_0 = arith.constant 0 : i32
    %c0_i32_1 = arith.constant 0 : i32
    return %c0_i32, %c0_i32_0 : i32, i32
  }
  func.func @transform_9(%arg0: i32) -> (i32, i32) {
    %c0_i32 = arith.constant 0 : i32
    %c0_i32_0 = arith.constant 0 : i32
    return %arg0, %c0_i32 : i32, i32
  }
  func.func @transform_10(%arg0: i32) -> (i32, i32) {
    %c0_i32 = arith.constant 0 : i32
    %c0_i32_0 = arith.constant 0 : i32
    return %arg0, %c0_i32 : i32, i32
  }
  func.func @transform_11(%arg0: i32) -> (i32, i32) {
    %c0_i32 = arith.constant 0 : i32
    %c0_i32_0 = arith.constant 0 : i32
    return %arg0, %c0_i32 : i32, i32
  }
}

</mosaic_0001>

<llo_original>
// kernel: adaegc_forward.2
$region0: #{adaegc_forward.2}
  #allocation0 [shape = 'u32[]', space=smem, size = 0x4, offset = 0x4, fixed_abs, tag = 'smem constant byte address 0x4 - core index']
  #allocation1 [shape = 'u32[72,128]{1,0:T(1,128)}', space=vmem, size = 0x9000, scoped, tag = 'internal scratch']
  %s0 = inlined_call_operand.vmem [shape: f32[16,2], index: 0, kind: input, shape index: {}]
  %s1 = inlined_call_operand.vmem [shape: f32[16,1], index: 1, kind: input, shape index: {}]
  %s2 = inlined_call_operand.vmem [shape: bf16[16,16], index: 2, kind: input, shape index: {}]
  %s3 = inlined_call_operand.vmem [shape: f32[2,16], index: 3, kind: input, shape index: {}]
  %s4 = inlined_call_operand.vmem [shape: f32[16,16], index: 4, kind: input, shape index: {}]
  %s5 = inlined_call_operand.vmem [shape: f32[1,16], index: 5, kind: input, shape index: {}]
  %s6 = inlined_call_operand.vmem [shape: f32[16,16], index: 6, kind: output, shape index: {}]
  %s7 = sld [smem:[#allocation0]]
  $region34: #{adaegc_forward.2} parent=0
    _
  %s9 = ssub.s32 1, %s7
  %s10 = scalar_select 0, %s9, %s7
  // Predicated region
  $region2: #{adaegc_forward.2} parent=0 // pred_check
    _
  $region3: #{adaegc_forward.2} parent=0 // pred_check_branch
    %12 = sbr.rel (0) target = $region5
  $region4: #{adaegc_forward.2} parent=0 // pred_region
    _
  $region5: #{adaegc_forward.2} parent=0 // pred_fallthru
    _
  // Predicated region
  $region6: #{adaegc_forward.2} parent=0 // pred_check
    _
  $region7: #{adaegc_forward.2} parent=0 // pred_check_branch
    %14 = sbr.rel (0) target = $region9
  $region8: #{adaegc_forward.2} parent=0 // pred_region
    _
  $region9: #{adaegc_forward.2} parent=0 // pred_fallthru
    _
  // Predicated region
  $region10: #{adaegc_forward.2} parent=0 // pred_check
    _
  $region11: #{adaegc_forward.2} parent=0 // pred_check_branch
    %16 = sbr.rel (0) target = $region13
  $region12: #{adaegc_forward.2} parent=0 // pred_region
    _
  $region13: #{adaegc_forward.2} parent=0 // pred_fallthru
    _
  // Predicated region
  $region14: #{adaegc_forward.2} parent=0 // pred_check
    _
  $region15: #{adaegc_forward.2} parent=0 // pred_check_branch
    %18 = sbr.rel (0) target = $region17
  $region16: #{adaegc_forward.2} parent=0 // pred_region
    _
  $region17: #{adaegc_forward.2} parent=0 // pred_fallthru
    _
  // Predicated region
  $region18: #{adaegc_forward.2} parent=0 // pred_check
    _
  $region19: #{adaegc_forward.2} parent=0 // pred_check_branch
    %20 = sbr.rel (0) target = $region21
  $region20: #{adaegc_forward.2} parent=0 // pred_region
    _
  $region21: #{adaegc_forward.2} parent=0 // pred_fallthru
    _
  // Predicated region
  $region22: #{adaegc_forward.2} parent=0 // pred_check
    _
  $region23: #{adaegc_forward.2} parent=0 // pred_check_branch
    %22 = sbr.rel (0) target = $region25
  $region24: #{adaegc_forward.2} parent=0 // pred_region
    _
  $region25: #{adaegc_forward.2} parent=0 // pred_fallthru
    _
  %v24 = vld [vmem:[%s2] sm:$0xf]
  %v25 = vld [vmem:[%s2 + $0x4] sm:$0xf]
  %v26 = vunpack.c.l.bf16 %v24
  %v27 = vunpack.c.l.bf16 %v25
  %vm28 = vcmp.gt.f32.partialorder %v26, 0.0
  %vm29 = vcmp.gt.f32.partialorder %v27, 0.0
  %v30 = vld [vmem:[%s1] sm:$0xff]
  %v31 = vld [vmem:[%s1 + $0x8] sm:$0xff]
  %v32 = vld [vmem:[%s4] sm:$0xff]
  %v33 = vld [vmem:[%s4 + $0x8] sm:$0xff]
  %v34 = vld [vmem:[%s0] sm:$0xff]
  %v35 = vld [vmem:[%s0 + $0x8] sm:$0xff]
  %v36 = vld [vmem:[%s3] sm:$0x3]
  %38 = vset.pattern.permute.xlu0 0
  %39 = vperm.xlu0 %38, %v34
  %v40 = vpop.permute.xlu0 %39
  %43 = vset.pattern.permute.xlu0 0
  %44 = vperm.xlu0 %43, %v35
  %v45 = vpop.permute.xlu0 %44
  %v47 = vperm.slane %v36, 0
  %v48 = vadd.f32 %v40, %v47
  %v49 = vadd.f32 %v45, %v47
  %51 = vset.pattern.permute.xlu0 0
  %52 = vperm.xlu0 %51, %v30
  %v53 = vpop.permute.xlu0 %52
  %56 = vset.pattern.permute.xlu0 0
  %57 = vperm.xlu0 %56, %v31
  %v58 = vpop.permute.xlu0 %57
  %v60 = vmul.f32 %v48, %v53
  %v61 = vmul.f32 %v49, %v58
  %vm62 = vcmp.gt.f32.partialorder %v60, 0.0
  %vm63 = vcmp.gt.f32.partialorder %v61, 0.0
  %v64 = vmul.f32 %v60, 0.2
  %v65 = vmul.f32 %v61, 0.2
  %v66 = vsel %vm62, %v60, %v64
  %v67 = vsel %vm63, %v61, %v65
  %v68 = vsel %vm28, %v66, -1e+30
  %v69 = vsel %vm29, %v67, -1e+30
  %vm70 = vcmask 130048
  %v71 = vsel %vm70, %v68, -inf
  %72 = vmax.xlane.f32.xlu0 %v71
  %v73 = vpop.xlane.xlu0 %72
  %v74 = vsel %vm70, %v69, -inf
  %75 = vmax.xlane.f32.xlu0 %v74
  %v76 = vpop.xlane.xlu0 %75
  %v77 = vsub.f32 %v68, %v73
  %v78 = vsub.f32 %v69, %v76
  %v79 = vmul.f32 %v77, 1.442695
  %v80 = vpow.pop %v79
  %v81 = vmul.f32 %v78, 1.442695
  %v82 = vpow.pop %v81
  %v83 = vsel %vm70, %v80, 0.0
  %84 = vadd.xlane.f32.xlu0 %v83
  %v85 = vpop.xlane.xlu0 %84
  %v86 = vsel %vm70, %v82, 0.0
  %87 = vadd.xlane.f32.xlu0 %v86
  %v88 = vpop.xlane.xlu0 %87
  %v89 = vrcp.pop %v85
  %v90 = vrcp.pop %v88
  %v91 = vpack.c.bf16 %v33, %v32
  %v92 = vpack.c.bf16 %v82, %v80
  %v94 = vsel %vm70, %v92, 0
  %96 = vmatpush.bf16.msra.mxu0 0
  %97 = vmatpush.bf16.msra.mxu0 0
  %98 = vmatpush.bf16.msra.mxu0 0
  %99 = vmatpush.bf16.msra.mxu0 0
  %100 = vmatpush.bf16.msra.mxu0 0
  %101 = vmatpush.bf16.msra.mxu0 0
  %102 = vmatpush.bf16.msra.mxu0 0
  %103 = vmatpush.bf16.msra.mxu0 %v91
  %104 = vmatmul.bf16.gmra.mxu0 %v94
  %v105 = vpop.f32.mrf.mxu0
  %v106 = vadd.f32 0.0, %v105
  %v107 = vpop.f32.mrf.mxu0
  %v108 = vadd.f32 0.0, %v107
  %109 = vdwg.mxu0
  %v110 = vmul.f32 %v106, %v89
  %v111 = vmul.f32 %v108, %v90
  %112 = vset.pattern.permute.xlu0 1
  %113 = vperm.xlu0 %112, %v34
  %v114 = vpop.permute.xlu0 %113
  %116 = vset.pattern.permute.xlu0 1
  %117 = vperm.xlu0 %116, %v35
  %v118 = vpop.permute.xlu0 %117
  %v120 = vperm.slane %v36, 1
  %v121 = vadd.f32 %v114, %v120
  %v122 = vadd.f32 %v118, %v120
  %v123 = vmul.f32 %v121, %v53
  %v124 = vmul.f32 %v122, %v58
  %vm125 = vcmp.gt.f32.partialorder %v123, 0.0
  %vm126 = vcmp.gt.f32.partialorder %v124, 0.0
  %v127 = vmul.f32 %v123, 0.2
  %v128 = vmul.f32 %v124, 0.2
  %v129 = vsel %vm125, %v123, %v127
  %v130 = vsel %vm126, %v124, %v128
  %v131 = vsel %vm28, %v129, -1e+30
  %v132 = vsel %vm29, %v130, -1e+30
  %v133 = vsel %vm70, %v131, -inf
  %134 = vmax.xlane.f32.xlu0 %v133
  %v135 = vpop.xlane.xlu0 %134
  %v136 = vsel %vm70, %v132, -inf
  %137 = vmax.xlane.f32.xlu0 %v136
  %v138 = vpop.xlane.xlu0 %137
  %v139 = vsub.f32 %v131, %v135
  %v140 = vsub.f32 %v132, %v138
  %v141 = vmul.f32 %v139, 1.442695
  %v142 = vpow.pop %v141
  %v143 = vmul.f32 %v140, 1.442695
  %v144 = vpow.pop %v143
  %v145 = vsel %vm70, %v142, 0.0
  %146 = vadd.xlane.f32.xlu0 %v145
  %v147 = vpop.xlane.xlu0 %146
  %v148 = vsel %vm70, %v144, 0.0
  %149 = vadd.xlane.f32.xlu0 %v148
  %v150 = vpop.xlane.xlu0 %149
  %v151 = vrcp.pop %v147
  %v152 = vrcp.pop %v150
  %v153 = vpack.c.bf16 %v144, %v142
  %155 = vrot.lane.b32.xlu0 %v91, 120
  %v156 = vpop.permute.xlu0 %155
  %v159 = vsel %vm70, %v153, 0
  %161 = vmatpush.bf16.msra.mxu0 0
  %162 = vmatpush.bf16.msra.mxu0 0
  %163 = vmatpush.bf16.msra.mxu0 0
  %164 = vmatpush.bf16.msra.mxu0 0
  %165 = vmatpush.bf16.msra.mxu0 0
  %166 = vmatpush.bf16.msra.mxu0 0
  %167 = vmatpush.bf16.msra.mxu0 0
  %168 = vmatpush.bf16.msra.mxu0 %v156
  %169 = vmatmul.bf16.gmra.mxu0 %v159
  %v170 = vpop.f32.mrf.mxu0
  %v171 = vadd.f32 0.0, %v170
  %v172 = vpop.f32.mrf.mxu0
  %v173 = vadd.f32 0.0, %v172
  %174 = vdwg.mxu0
  %v175 = vmul.f32 %v171, %v151
  %v176 = vmul.f32 %v173, %v152
  %179 = vrot.lane.b32.xlu0 %v175, 8
  %v180 = vpop.permute.xlu0 %179
  %181 = vrot.lane.b32.xlu0 %v176, 8
  %v182 = vpop.permute.xlu0 %181
  %vm185 = vcmask 64512
  %v186 = vsel %vm185, %v110, %v180
  %v187 = vsel %vm185, %v111, %v182
  %v188 = vld [vmem:[%s5] sm:$0x1]
  %v190 = vperm.slane %v188, 0
  %v192 = vadd.f32 %v186, %v190
  %v193 = vadd.f32 %v187, %v190
  %vm194 = vcmp.gt.f32.partialorder %v192, 0.0
  %vm195 = vcmp.gt.f32.partialorder %v193, 0.0
  %v196 = vmin.f32 %v192, 0.0
  %v197 = vmin.f32 %v193, 0.0
  %v198 = vmul.f32 %v196, 1.442695
  %v199 = vpow.pop %v198
  %v200 = vmul.f32 %v197, 1.442695
  %v201 = vpow.pop %v200
  %v202 = vsub.f32 %v199, 1.0
  %v203 = vsub.f32 %v201, 1.0
  %v204 = vsel %vm194, %v192, %v202
  %v205 = vsel %vm195, %v193, %v203
  %206 = vst.msk [vmem:[%s6] sm:$0xff] %vm70, %v204
  %207 = vst.msk [vmem:[%s6 + $0x8] sm:$0xff] %vm70, %v205
  // Predicated region
  $region26: #{adaegc_forward.2} parent=0 // pred_check
    _
  $region27: #{adaegc_forward.2} parent=0 // pred_check_branch
    %209 = sbr.rel (0) target = $region29
  $region28: #{adaegc_forward.2} parent=0 // pred_region
    _
  $region29: #{adaegc_forward.2} parent=0 // pred_fallthru
    _
  // Predicated region
  $region30: #{adaegc_forward.2} parent=0 // pred_check
    _
  $region31: #{adaegc_forward.2} parent=0 // pred_check_branch
    %211 = sbr.rel (0) target = $region33
  $region32: #{adaegc_forward.2} parent=0 // pred_region
    _
  $region33: #{adaegc_forward.2} parent=0 // pred_fallthru
    _

// kernel: adaegc_forward.3
$region0: #{adaegc_forward.3}
  #allocation0 [shape = 'u32[]', space=smem, size = 0x4, offset = 0x4, fixed_abs, tag = 'smem constant byte address 0x4 - core index']
  #allocation1 [shape = 'u32[72,128]{1,0:T(1,128)}', space=vmem, size = 0x9000, scoped, tag = 'internal scratch']
  %s0 = inlined_call_operand.vmem [shape: f32[16,2], index: 0, kind: input, shape index: {}]
  %s1 = inlined_call_operand.vmem [shape: f32[16,1], index: 1, kind: input, shape index: {}]
  %s2 = inlined_call_operand.vmem [shape: bf16[16,16], index: 2, kind: input, shape index: {}]
  %s3 = inlined_call_operand.vmem [shape: f32[2,16], index: 3, kind: input, shape index: {}]
  %s4 = inlined_call_operand.vmem [shape: f32[16,16], index: 4, kind: input, shape index: {}]
  %s5 = inlined_call_operand.vmem [shape: f32[1,8], index: 5, kind: input, shape index: {}]
  %s6 = inlined_call_operand.vmem [shape: f32[8,4], index: 6, kind: input, shape index: {}]
  %s7 = inlined_call_operand.vmem [shape: f32[1,4], index: 7, kind: input, shape index: {}]
  %s8 = inlined_call_operand.vmem [shape: f32[8,4], index: 8, kind: input, shape index: {}]
  %s9 = inlined_call_operand.vmem [shape: f32[16,8], index: 9, kind: output, shape index: {0}]
  %s10 = inlined_call_operand.vmem [shape: f32[16,4], index: 10, kind: output, shape index: {1}]
  %s11 = inlined_call_operand.vmem [shape: f32[16,4], index: 11, kind: output, shape index: {2}]
  %12 = xla_tuple %s9, %s10, %s11
  %s13 = sld [smem:[#allocation0]]
  $region62: #{adaegc_forward.3} parent=0
    _
  %s15 = ssub.s32 1, %s13
  %s16 = scalar_select 0, %s15, %s13
  // Predicated region
  $region2: #{adaegc_forward.3} parent=0 // pred_check
    _
  $region3: #{adaegc_forward.3} parent=0 // pred_check_branch
    %18 = sbr.rel (0) target = $region5
  $region4: #{adaegc_forward.3} parent=0 // pred_region
    _
  $region5: #{adaegc_forward.3} parent=0 // pred_fallthru
    _
  // Predicated region
  $region6: #{adaegc_forward.3} parent=0 // pred_check
    _
  $region7: #{adaegc_forward.3} parent=0 // pred_check_branch
    %20 = sbr.rel (0) target = $region9
  $region8: #{adaegc_forward.3} parent=0 // pred_region
    _
  $region9: #{adaegc_forward.3} parent=0 // pred_fallthru
    _
  // Predicated region
  $region10: #{adaegc_forward.3} parent=0 // pred_check
    _
  $region11: #{adaegc_forward.3} parent=0 // pred_check_branch
    %22 = sbr.rel (0) target = $region13
  $region12: #{adaegc_forward.3} parent=0 // pred_region
    _
  $region13: #{adaegc_forward.3} parent=0 // pred_fallthru
    _
  // Predicated region
  $region14: #{adaegc_forward.3} parent=0 // pred_check
    _
  $region15: #{adaegc_forward.3} parent=0 // pred_check_branch
    %24 = sbr.rel (0) target = $region17
  $region16: #{adaegc_forward.3} parent=0 // pred_region
    _
  $region17: #{adaegc_forward.3} parent=0 // pred_fallthru
    _
  // Predicated region
  $region18: #{adaegc_forward.3} parent=0 // pred_check
    _
  $region19: #{adaegc_forward.3} parent=0 // pred_check_branch
    %26 = sbr.rel (0) target = $region21
  $region20: #{adaegc_forward.3} parent=0 // pred_region
    _
  $region21: #{adaegc_forward.3} parent=0 // pred_fallthru
    _
  // Predicated region
  $region22: #{adaegc_forward.3} parent=0 // pred_check
    _
  $region23: #{adaegc_forward.3} parent=0 // pred_check_branch
    %28 = sbr.rel (0) target = $region25
  $region24: #{adaegc_forward.3} parent=0 // pred_region
    _
  $region25: #{adaegc_forward.3} parent=0 // pred_fallthru
    _
  // Predicated region
  $region26: #{adaegc_forward.3} parent=0 // pred_check
    _
  $region27: #{adaegc_forward.3} parent=0 // pred_check_branch
    %30 = sbr.rel (0) target = $region29
  $region28: #{adaegc_forward.3} parent=0 // pred_region
    _
  $region29: #{adaegc_forward.3} parent=0 // pred_fallthru
    _
  // Predicated region
  $region30: #{adaegc_forward.3} parent=0 // pred_check
    _
  $region31: #{adaegc_forward.3} parent=0 // pred_check_branch
    %32 = sbr.rel (0) target = $region33
  $region32: #{adaegc_forward.3} parent=0 // pred_region
    _
  $region33: #{adaegc_forward.3} parent=0 // pred_fallthru
    _
  // Predicated region
  $region34: #{adaegc_forward.3} parent=0 // pred_check
    _
  $region35: #{adaegc_forward.3} parent=0 // pred_check_branch
    %34 = sbr.rel (0) target = $region37
  $region36: #{adaegc_forward.3} parent=0 // pred_region
    _
  $region37: #{adaegc_forward.3} parent=0 // pred_fallthru
    _
  %v36 = vld [vmem:[%s2] sm:$0xf]
  %v37 = vld [vmem:[%s2 + $0x4] sm:$0xf]
  %v38 = vunpack.c.l.bf16 %v36
  %v39 = vunpack.c.l.bf16 %v37
  %vm40 = vcmp.gt.f32.partialorder %v38, 0.0
  %vm41 = vcmp.gt.f32.partialorder %v39, 0.0
  %v42 = vld [vmem:[%s1] sm:$0xff]
  %v43 = vld [vmem:[%s1 + $0x8] sm:$0xff]
  %v44 = vld [vmem:[%s4] sm:$0xff]
  %v45 = vld [vmem:[%s4 + $0x8] sm:$0xff]
  %v46 = vld [vmem:[%s0] sm:$0xff]
  %v47 = vld [vmem:[%s0 + $0x8] sm:$0xff]
  %v48 = vld [vmem:[%s3] sm:$0x3]
  %50 = vset.pattern.permute.xlu0 0
  %51 = vperm.xlu0 %50, %v46
  %v52 = vpop.permute.xlu0 %51
  %55 = vset.pattern.permute.xlu0 0
  %56 = vperm.xlu0 %55, %v47
  %v57 = vpop.permute.xlu0 %56
  %v59 = vperm.slane %v48, 0
  %v60 = vadd.f32 %v52, %v59
  %v61 = vadd.f32 %v57, %v59
  %63 = vset.pattern.permute.xlu0 0
  %64 = vperm.xlu0 %63, %v42
  %v65 = vpop.permute.xlu0 %64
  %68 = vset.pattern.permute.xlu0 0
  %69 = vperm.xlu0 %68, %v43
  %v70 = vpop.permute.xlu0 %69
  %v72 = vmul.f32 %v60, %v65
  %v73 = vmul.f32 %v61, %v70
  %vm74 = vcmp.gt.f32.partialorder %v72, 0.0
  %vm75 = vcmp.gt.f32.partialorder %v73, 0.0
  %v76 = vmul.f32 %v72, 0.2
  %v77 = vmul.f32 %v73, 0.2
  %v78 = vsel %vm74, %v72, %v76
  %v79 = vsel %vm75, %v73, %v77
  %v80 = vsel %vm40, %v78, -1e+30
  %v81 = vsel %vm41, %v79, -1e+30
  %vm82 = vcmask 130048
  %v83 = vsel %vm82, %v80, -inf
  %84 = vmax.xlane.f32.xlu0 %v83
  %v85 = vpop.xlane.xlu0 %84
  %v86 = vsel %vm82, %v81, -inf
  %87 = vmax.xlane.f32.xlu0 %v86
  %v88 = vpop.xlane.xlu0 %87
  %v89 = vsub.f32 %v80, %v85
  %v90 = vsub.f32 %v81, %v88
  %v91 = vmul.f32 %v89, 1.442695
  %v92 = vpow.pop %v91
  %v93 = vmul.f32 %v90, 1.442695
  %v94 = vpow.pop %v93
  %v95 = vsel %vm82, %v92, 0.0
  %96 = vadd.xlane.f32.xlu0 %v95
  %v97 = vpop.xlane.xlu0 %96
  %v98 = vsel %vm82, %v94, 0.0
  %99 = vadd.xlane.f32.xlu0 %v98
  %v100 = vpop.xlane.xlu0 %99
  %v101 = vrcp.pop %v97
  %v102 = vrcp.pop %v100
  %v103 = vpack.c.bf16 %v45, %v44
  %v104 = vpack.c.bf16 %v94, %v92
  %v106 = vsel %vm82, %v104, 0
  %108 = vmatpush.bf16.msra.mxu0 0
  %109 = vmatpush.bf16.msra.mxu0 0
  %110 = vmatpush.bf16.msra.mxu0 0
  %111 = vmatpush.bf16.msra.mxu0 0
  %112 = vmatpush.bf16.msra.mxu0 0
  %113 = vmatpush.bf16.msra.mxu0 0
  %114 = vmatpush.bf16.msra.mxu0 0
  %115 = vmatpush.bf16.msra.mxu0 %v103
  %116 = vmatmul.bf16.gmra.mxu0 %v106
  %v117 = vpop.f32.mrf.mxu0
  %v118 = vadd.f32 0.0, %v117
  %v119 = vpop.f32.mrf.mxu0
  %v120 = vadd.f32 0.0, %v119
  %121 = vdwg.mxu0
  %v122 = vmul.f32 %v118, %v101
  %v123 = vmul.f32 %v120, %v102
  %124 = vset.pattern.permute.xlu0 1
  %125 = vperm.xlu0 %124, %v46
  %v126 = vpop.permute.xlu0 %125
  %128 = vset.pattern.permute.xlu0 1
  %129 = vperm.xlu0 %128, %v47
  %v130 = vpop.permute.xlu0 %129
  %v132 = vperm.slane %v48, 1
  %v133 = vadd.f32 %v126, %v132
  %v134 = vadd.f32 %v130, %v132
  %v135 = vmul.f32 %v133, %v65
  %v136 = vmul.f32 %v134, %v70
  %vm137 = vcmp.gt.f32.partialorder %v135, 0.0
  %vm138 = vcmp.gt.f32.partialorder %v136, 0.0
  %v139 = vmul.f32 %v135, 0.2
  %v140 = vmul.f32 %v136, 0.2
  %v141 = vsel %vm137, %v135, %v139
  %v142 = vsel %vm138, %v136, %v140
  %v143 = vsel %vm40, %v141, -1e+30
  %v144 = vsel %vm41, %v142, -1e+30
  %v145 = vsel %vm82, %v143, -inf
  %146 = vmax.xlane.f32.xlu0 %v145
  %v147 = vpop.xlane.xlu0 %146
  %v148 = vsel %vm82, %v144, -inf
  %149 = vmax.xlane.f32.xlu0 %v148
  %v150 = vpop.xlane.xlu0 %149
  %v151 = vsub.f32 %v143, %v147
  %v152 = vsub.f32 %v144, %v150
  %v153 = vmul.f32 %v151, 1.442695
  %v154 = vpow.pop %v153
  %v155 = vmul.f32 %v152, 1.442695
  %v156 = vpow.pop %v155
  %v157 = vsel %vm82, %v154, 0.0
  %158 = vadd.xlane.f32.xlu0 %v157
  %v159 = vpop.xlane.xlu0 %158
  %v160 = vsel %vm82, %v156, 0.0
  %161 = vadd.xlane.f32.xlu0 %v160
  %v162 = vpop.xlane.xlu0 %161
  %v163 = vrcp.pop %v159
  %v164 = vrcp.pop %v162
  %v165 = vpack.c.bf16 %v156, %v154
  %167 = vrot.lane.b32.xlu0 %v103, 120
  %v168 = vpop.permute.xlu0 %167
  %v171 = vsel %vm82, %v165, 0
  %173 = vmatpush.bf16.msra.mxu0 0
  %174 = vmatpush.bf16.msra.mxu0 0
  %175 = vmatpush.bf16.msra.mxu0 0
  %176 = vmatpush.bf16.msra.mxu0 0
  %177 = vmatpush.bf16.msra.mxu0 0
  %178 = vmatpush.bf16.msra.mxu0 0
  %179 = vmatpush.bf16.msra.mxu0 0
  %180 = vmatpush.bf16.msra.mxu0 %v168
  %181 = vmatmul.bf16.gmra.mxu0 %v171
  %v182 = vpop.f32.mrf.mxu0
  %v183 = vadd.f32 0.0, %v182
  %v184 = vpop.f32.mrf.mxu0
  %v185 = vadd.f32 0.0, %v184
  %186 = vdwg.mxu0
  %v187 = vmul.f32 %v183, %v163
  %v188 = vmul.f32 %v185, %v164
  %v189 = vadd.f32 %v122, 0.0
  %v190 = vadd.f32 %v123, 0.0
  %v191 = vadd.f32 %v189, %v187
  %v192 = vadd.f32 %v190, %v188
  %v193 = vmul.f32 %v191, 0.5
  %v194 = vmul.f32 %v192, 0.5
  %v195 = vld [vmem:[%s5] sm:$0x1]
  %v197 = vperm.slane %v195, 0
  %v199 = vadd.f32 %v193, %v197
  %v200 = vadd.f32 %v194, %v197
  %vm201 = vcmask 64512
  %202 = vst.msk [vmem:[%s9] sm:$0xff] %vm201, %v199
  %203 = vst.msk [vmem:[%s9 + $0x8] sm:$0xff] %vm201, %v200
  %v204 = vmax.f32 %v199, 0.0
  %v205 = vmax.f32 %v200, 0.0
  %v206 = vld [vmem:[%s6] sm:$0xff]
  %v207 = vld [vmem:[%s7] sm:$0x1]
  %v209 = vperm.slane %v207, 0
  %v212 = vsel %vm201, %v204, 0
  %v215 = vsel %vm201, %v205, 0
  %217 = vmatpush.msra.mxu0 0.0
  %218 = vmatpush.msra.mxu0 0.0
  %219 = vmatpush.msra.mxu0 0.0
  %220 = vmatpush.msra.mxu0 0.0
  %221 = vmatpush.msra.mxu0 0.0
  %222 = vmatpush.msra.mxu0 0.0
  %223 = vmatpush.msra.mxu0 0.0
  %224 = vmatpush.msra.mxu0 0.0
  %225 = vmatpush.msra.mxu0 0.0
  %226 = vmatpush.msra.mxu0 0.0
  %227 = vmatpush.msra.mxu0 0.0
  %228 = vmatpush.msra.mxu0 0.0
  %229 = vmatpush.msra.mxu0 0.0
  %230 = vmatpush.msra.mxu0 0.0
  %231 = vmatpush.msra.mxu0 0.0
  %232 = vmatpush.msra.mxu0 %v206
  %233 = vmatmul.f32.gmra.mxu0 %v212
  %v234 = vpop.f32.mrf.mxu0
  %v235 = vadd.f32 %v209, %v234
  %236 = vmatmul.f32.gmra.mxu0 %v215
  %v237 = vpop.f32.mrf.mxu0
  %v238 = vadd.f32 %v209, %v237
  %239 = vdwg.mxu0
  %vm240 = vcmask 31744
  %v241 = vsel %vm240, %v235, -inf
  %242 = vmax.xlane.f32.xlu0 %v241
  %v243 = vpop.xlane.xlu0 %242
  %v244 = vsel %vm240, %v238, -inf
  %245 = vmax.xlane.f32.xlu0 %v244
  %v246 = vpop.xlane.xlu0 %245
  %v247 = vsub.f32 %v235, %v243
  %v248 = vsub.f32 %v238, %v246
  %v249 = vmul.f32 %v247, 1.442695
  %v250 = vpow.pop %v249
  %v251 = vmul.f32 %v248, 1.442695
  %v252 = vpow.pop %v251
  %v253 = vsel %vm240, %v250, 0.0
  %254 = vadd.xlane.f32.xlu0 %v253
  %v255 = vpop.xlane.xlu0 %254
  %v256 = vsel %vm240, %v252, 0.0
  %257 = vadd.xlane.f32.xlu0 %v256
  %v258 = vpop.xlane.xlu0 %257
  %v259 = vlog2.pop %v255
  %v260 = vmul.f32 %v259, 0.6931472
  %v261 = vlog2.pop %v258
  %v262 = vmul.f32 %v261, 0.6931472
  %v263 = vadd.f32 %v243, %v260
  %v264 = vadd.f32 %v246, %v262
  %v265 = vsub.f32 %v235, %v263
  %v266 = vsub.f32 %v238, %v264
  %267 = vst.msk [vmem:[%s11] sm:$0xff] %vm240, %v265
  %268 = vst.msk [vmem:[%s11 + $0x8] sm:$0xff] %vm240, %v266
  %v269 = vld [vmem:[%s8] sm:$0xff]
  %v270 = vmul.f32 %v199, %v199
  %v271 = vmul.f32 %v200, %v200
  %v272 = vsel %vm201, %v270, 0.0
  %273 = vadd.xlane.f32.xlu0 %v272
  %v274 = vpop.xlane.xlu0 %273
  %v275 = vsel %vm201, %v271, 0.0
  %276 = vadd.xlane.f32.xlu0 %v275
  %v277 = vpop.xlane.xlu0 %276
  %v278 = vmul.f32 %v269, %v269
  %v279 = vsel %vm240, %v278, 0.0
  %v280 = vrot.slane %v279, 4
  %v281 = vadd.f32 %v279, %v280
  %v282 = vrot.slane %v281, 2
  %v283 = vadd.f32 %v281, %v282
  %v284 = vrot.slane %v283, 1
  %v285 = vadd.f32 %v283, %v284
  %v287 = vsel %vm201, %v199, 0
  %v290 = vsel %vm201, %v200, 0
  %292 = vmatpush.msra.mxu0 0.0
  %293 = vmatpush.msra.mxu0 0.0
  %294 = vmatpush.msra.mxu0 0.0
  %295 = vmatpush.msra.mxu0 0.0
  %296 = vmatpush.msra.mxu0 0.0
  %297 = vmatpush.msra.mxu0 0.0
  %298 = vmatpush.msra.mxu0 0.0
  %299 = vmatpush.msra.mxu0 0.0
  %300 = vmatpush.msra.mxu0 0.0
  %301 = vmatpush.msra.mxu0 0.0
  %302 = vmatpush.msra.mxu0 0.0
  %303 = vmatpush.msra.mxu0 0.0
  %304 = vmatpush.msra.mxu0 0.0
  %305 = vmatpush.msra.mxu0 0.0
  %306 = vmatpush.msra.mxu0 0.0
  %307 = vmatpush.msra.mxu0 %v269
  %308 = vmatmul.f32.gmra.mxu0 %v287
  %v309 = vpop.f32.mrf.mxu0
  %v310 = vadd.f32 0.0, %v309
  %311 = vmatmul.f32.gmra.mxu0 %v290
  %v312 = vpop.f32.mrf.mxu0
  %v313 = vadd.f32 0.0, %v312
  %314 = vdwg.mxu0
  %v315 = vadd.f32 %v274, %v285
  %v316 = vadd.f32 %v277, %v285
  %v317 = vmul.f32 %v310, 2.0
  %v318 = vmul.f32 %v313, 2.0
  %v319 = vsub.f32 %v315, %v317
  %v320 = vsub.f32 %v316, %v318
  %v321 = vmax.f32 %v319, 0.0
  %v322 = vmax.f32 %v320, 0.0
  %v323 = vadd.f32 %v321, 1.0
  %v324 = vadd.f32 %v322, 1.0
  %v325 = vrcp.pop %v323
  %v326 = vmul.f32 %v323, %v325
  %v327 = vsub.f32 1.0, %v326
  %v328 = vmul.f32 %v325, %v327
  %v329 = vadd.f32 %v325, %v328
  %vm330 = vweird.f32 %v323
  %vm331 = vweird.f32 %v325
  %vm332 = vmor %vm330, %vm331
  %v333 = vsel %vm332, %v325, %v329
  %v334 = vand.u32 2147483647, %v323
  %vm335 = vcmp.eq.f32.partialorder %v334, 8.507059e+37
  %v336 = vand.u32 %v323, 2147483648
  %v337 = vor.u32 1.1754944e-38, %v336
  %v338 = vsel %vm335, %v337, %v333
  %v339 = vmul.f32 1.0, %v338
  %v340 = vrcp.pop %v324
  %v341 = vmul.f32 %v324, %v340
  %v342 = vsub.f32 1.0, %v341
  %v343 = vmul.f32 %v340, %v342
  %v344 = vadd.f32 %v340, %v343
  %vm345 = vweird.f32 %v324
  %vm346 = vweird.f32 %v340
  %vm347 = vmor %vm345, %vm346
  %v348 = vsel %vm347, %v340, %v344
  %v349 = vand.u32 2147483647, %v324
  %vm350 = vcmp.eq.f32.partialorder %v349, 8.507059e+37
  %v351 = vand.u32 %v324, 2147483648
  %v352 = vor.u32 1.1754944e-38, %v351
  %v353 = vsel %vm350, %v352, %v348
  %v354 = vmul.f32 1.0, %v353
  %v355 = vsel %vm240, %v339, 0.0
  %356 = vadd.xlane.f32.xlu0 %v355
  %v357 = vpop.xlane.xlu0 %356
  %v358 = vsel %vm240, %v354, 0.0
  %359 = vadd.xlane.f32.xlu0 %v358
  %v360 = vpop.xlane.xlu0 %359
  %v361 = vrcp.pop %v357
  %v362 = vmul.f32 %v357, %v361
  %v363 = vsub.f32 1.0, %v362
  %v364 = vmul.f32 %v361, %v363
  %v365 = vadd.f32 %v361, %v364
  %vm366 = vweird.f32 %v357
  %vm367 = vweird.f32 %v361
  %vm368 = vmor %vm366, %vm367
  %v369 = vsel %vm368, %v361, %v365
  %v370 = vand.u32 2147483647, %v357
  %vm371 = vcmp.eq.f32.partialorder %v370, 8.507059e+37
  %v372 = vand.u32 %v357, 2147483648
  %v373 = vor.u32 1.1754944e-38, %v372
  %v374 = vsel %vm371, %v373, %v369
  %v375 = vmul.f32 %v339, %v374
  %v376 = vrcp.pop %v360
  %v377 = vmul.f32 %v360, %v376
  %v378 = vsub.f32 1.0, %v377
  %v379 = vmul.f32 %v376, %v378
  %v380 = vadd.f32 %v376, %v379
  %vm381 = vweird.f32 %v360
  %vm382 = vweird.f32 %v376
  %vm383 = vmor %vm381, %vm382
  %v384 = vsel %vm383, %v376, %v380
  %v385 = vand.u32 2147483647, %v360
  %vm386 = vcmp.eq.f32.partialorder %v385, 8.507059e+37
  %v387 = vand.u32 %v360, 2147483648
  %v388 = vor.u32 1.1754944e-38, %v387
  %v389 = vsel %vm386, %v388, %v384
  %v390 = vmul.f32 %v354, %v389
  %391 = vst.msk [vmem:[%s10] sm:$0xff] %vm240, %v375
  %392 = vst.msk [vmem:[%s10 + $0x8] sm:$0xff] %vm240, %v390
  // Predicated region
  $region38: #{adaegc_forward.3} parent=0 // pred_check
    _
  $region39: #{adaegc_forward.3} parent=0 // pred_check_branch
    %394 = sbr.rel (0) target = $region41
  $region40: #{adaegc_forward.3} parent=0 // pred_region
    _
  $region41: #{adaegc_forward.3} parent=0 // pred_fallthru
    _
  // Predicated region
  $region42: #{adaegc_forward.3} parent=0 // pred_check
    _
  $region43: #{adaegc_forward.3} parent=0 // pred_check_branch
    %396 = sbr.rel (0) target = $region45
  $region44: #{adaegc_forward.3} parent=0 // pred_region
    _
  $region45: #{adaegc_forward.3} parent=0 // pred_fallthru
    _
  // Predicated region
  $region46: #{adaegc_forward.3} parent=0 // pred_check
    _
  $region47: #{adaegc_forward.3} parent=0 // pred_check_branch
    %398 = sbr.rel (0) target = $region49
  $region48: #{adaegc_forward.3} parent=0 // pred_region
    _
  $region49: #{adaegc_forward.3} parent=0 // pred_fallthru
    _
  // Predicated region
  $region50: #{adaegc_forward.3} parent=0 // pred_check
    _
  $region51: #{adaegc_forward.3} parent=0 // pred_check_branch
    %400 = sbr.rel (0) target = $region53
  $region52: #{adaegc_forward.3} parent=0 // pred_region
    _
  $region53: #{adaegc_forward.3} parent=0 // pred_fallthru
    _
  // Predicated region
  $region54: #{adaegc_forward.3} parent=0 // pred_check
    _
  $region55: #{adaegc_forward.3} parent=0 // pred_check_branch
    %402 = sbr.rel (0) target = $region57
  $region56: #{adaegc_forward.3} parent=0 // pred_region
    _
  $region57: #{adaegc_forward.3} parent=0 // pred_fallthru
    _
  // Predicated region
  $region58: #{adaegc_forward.3} parent=0 // pred_check
    _
  $region59: #{adaegc_forward.3} parent=0 // pred_check_branch
    %404 = sbr.rel (0) target = $region61
  $region60: #{adaegc_forward.3} parent=0 // pred_region
    _
  $region61: #{adaegc_forward.3} parent=0 // pred_fallthru
    _

</llo_original>
